<compile_context>
chip_gen: v7x
topology: tpu7x:2x2x1
jax: 0.10.0
libtpu: 0.0.40
codegen_flags: <defaults>
</compile_context>

<pallas_src>
import math

import jax
import jax.numpy as jnp
from jax import lax
from jax.experimental import pallas as pl
from jax.experimental.pallas import tpu as pltpu


# --------------------------- tiled linear kernel --------------------------- #
def _linear_kernel(x_ref, w_ref, b_ref, o_ref, acc_ref):
    k = pl.program_id(2)

    @pl.when(k == 0)
    def _():
        acc_ref[...] = jnp.zeros_like(acc_ref)

    # bf16 operands into the MXU, f32 accumulation.
    acc_ref[...] += jnp.dot(
        x_ref[...].astype(jnp.bfloat16),
        w_ref[...].astype(jnp.bfloat16),
        preferred_element_type=jnp.float32,
    )

    @pl.when(k == pl.num_programs(2) - 1)
    def _():
        # bias added once per output tile (not per K step)
        o_ref[...] = (acc_ref[...] + b_ref[...].astype(jnp.float32)).astype(o_ref.dtype)


def _pad_axis(arr, axis, multiple):
    pad = (-arr.shape[axis]) % multiple
    if pad == 0:
        return arr
    widths = [(0, 0)] * arr.ndim
    widths[axis] = (0, pad)
    return jnp.pad(arr, widths)


def _tile(dim, pref):
    # Full-extent block for small dims (always layout-legal, no padding);
    # otherwise the preferred tile (transformer shapes are usually multiples).
    return dim if dim <= pref else pref


def linear(x2d, w, b, *, bm=256, bn=256, bk=512):
    """x2d: (N, Cin) @ w: (Cin, Cout) + b: (Cout,) -> (N, Cout), K innermost."""
    N, Cin = x2d.shape
    Cout = w.shape[1]

    tm, tn, tk = _tile(N, bm), _tile(Cout, bn), _tile(Cin, bk)

    # Padding only triggers when a dim exceeds its tile and is not a multiple
    # of it (rare; the test shapes and typical transformer shapes skip it).
    xp = _pad_axis(_pad_axis(x2d, 0, tm), 1, tk)
    wp = _pad_axis(_pad_axis(w, 0, tk), 1, tn)
    bp = _pad_axis(b.reshape(1, Cout), 1, tn)
    Np, Kp = xp.shape
    Cp = wp.shape[1]

    grid = (Np // tm, Cp // tn, Kp // tk)

    out = pl.pallas_call(
        _linear_kernel,
        out_shape=jax.ShapeDtypeStruct((Np, Cp), x2d.dtype),
        grid_spec=pltpu.PrefetchScalarGridSpec(
            num_scalar_prefetch=0,
            grid=grid,
            in_specs=[
                pl.BlockSpec((tm, tk), lambda i, j, k: (i, k)),
                pl.BlockSpec((tk, tn), lambda i, j, k: (k, j)),
                pl.BlockSpec((1, tn), lambda i, j, k: (0, j)),
            ],
            out_specs=pl.BlockSpec((tm, tn), lambda i, j, k: (i, j)),
            scratch_shapes=[pltpu.VMEM((tm, tn), jnp.float32)],
        ),
        compiler_params=pltpu.CompilerParams(
            dimension_semantics=("parallel", "parallel", "arbitrary")
        ),
        cost_estimate=pl.CostEstimate(
            flops=2 * Np * Kp * Cp,
            transcendentals=0,
            bytes_accessed=int(
                xp.size * xp.dtype.itemsize
                + wp.size * wp.dtype.itemsize
                + bp.size * bp.dtype.itemsize
                + Np * Cp * jnp.dtype(x2d.dtype).itemsize
            ),
        ),
    )(xp, wp, bp)
    if (Np, Cp) != (N, Cout):
        out = out[:N, :Cout]
    return out


# ---------------------------- attention kernel ----------------------------- #
def _attn_kernel(q_ref, k_ref, v_ref, qc_ref, kc_ref, vc_ref, o_ref):
    # One (batch, head) pair per grid step; blocks are (1, 1, T(or Tc), hd).
    T = q_ref.shape[2]

    # bf16 operands for the MXU; softmax math stays f32. Scale is pre-folded
    # into Wq / Wcq at parameter-prep time.
    q = q_ref[0, 0].astype(jnp.bfloat16)   # (T, hd)
    k = k_ref[0, 0].astype(jnp.bfloat16)
    v = v_ref[0, 0].astype(jnp.bfloat16)
    qc = qc_ref[0, 0].astype(jnp.bfloat16)
    kc = kc_ref[0, 0].astype(jnp.bfloat16)
    vc = vc_ref[0, 0].astype(jnp.bfloat16)

    # contract head_dim of both operands directly -> no .T / XLU transpose
    dn = (((1,), (1,)), ((), ()))

    # causal self-attention
    s = lax.dot_general(q, k, dn, preferred_element_type=jnp.float32)
    row = lax.broadcasted_iota(jnp.int32, (T, T), 0)
    col = lax.broadcasted_iota(jnp.int32, (T, T), 1)
    s = jnp.where(col <= row, s, jnp.float32(-1e30))
    p = jnp.exp(s - jnp.max(s, axis=-1, keepdims=True))
    inv_l = pl.reciprocal(jnp.sum(p, axis=-1, keepdims=True), approx=True)
    y = jnp.dot(p.astype(jnp.bfloat16), v, preferred_element_type=jnp.float32) * inv_l

    # cross-attention (unmasked)
    sc = lax.dot_general(qc, kc, dn, preferred_element_type=jnp.float32)
    pc = jnp.exp(sc - jnp.max(sc, axis=-1, keepdims=True))
    inv_lc = pl.reciprocal(jnp.sum(pc, axis=-1, keepdims=True), approx=True)
    yc = jnp.dot(pc.astype(jnp.bfloat16), vc, preferred_element_type=jnp.float32) * inv_lc

    o_ref[0, 0] = (y + yc).astype(o_ref.dtype)


def attention(q, k, v, qc, kc, vc):
    """Inputs per-head: q/k/v/qc (B,H,T,hd), kc/vc (B,H,Tc,hd) -> (B,H,T,hd)."""
    B, H, T, hd = q.shape
    Tc = kc.shape[2]
    itemsize = jnp.dtype(q.dtype).itemsize

    spec_t = pl.BlockSpec((1, 1, T, hd), lambda b, h: (b, h, 0, 0))
    spec_c = pl.BlockSpec((1, 1, Tc, hd), lambda b, h: (b, h, 0, 0))

    return pl.pallas_call(
        _attn_kernel,
        out_shape=jax.ShapeDtypeStruct((B, H, T, hd), q.dtype),
        grid=(B, H),
        in_specs=[spec_t, spec_t, spec_t, spec_t, spec_c, spec_c],
        out_specs=spec_t,
        compiler_params=pltpu.CompilerParams(
            dimension_semantics=("parallel", "parallel")
        ),
        cost_estimate=pl.CostEstimate(
            flops=4 * B * H * T * (T + Tc) * hd,
            transcendentals=B * H * T * (T + Tc),
            bytes_accessed=int(itemsize * B * H * hd * (5 * T + 2 * Tc)),
        ),
    )(q, k, v, qc, kc, vc)


# --------------------------- parameter preparation ------------------------- #
def prepare_params(params):
    """One-time prep: fuse projection weights, fold 1/sqrt(hd) into Wq/Wcq
    (and their biases), and pre-cast weights to bf16 (biases stay f32)."""
    H = params["n_head"]
    C = params["Wq"].shape[0]
    hd = C // H
    scale = 1.0 / math.sqrt(hd)

    Wq = params["Wq"] * scale
    bq = params["bq"] * scale
    Wcq = params["Wcq"] * scale
    bcq = params["bcq"] * scale

    W_self = jnp.concatenate([Wq, params["Wk"], params["Wv"], Wcq], axis=1)
    b_self = jnp.concatenate([bq, params["bk"], params["bv"], bcq], axis=0)
    W_cross = jnp.concatenate([params["Wck"], params["Wcv"]], axis=1)
    b_cross = jnp.concatenate([params["bck"], params["bcv"]], axis=0)

    return {
        "n_head": H,
        "W_self": W_self.astype(jnp.bfloat16),
        "b_self": b_self.astype(jnp.float32),
        "W_cross": W_cross.astype(jnp.bfloat16),
        "b_cross": b_cross.astype(jnp.float32),
        "Wp": params["Wp"].astype(jnp.bfloat16),
        "bp": params["bp"].astype(jnp.float32),
    }


# ------------------------------ full forward ------------------------------- #
def causal_self_cross_attention(prepared, x, cross_input):
    B, T, C = x.shape
    H = prepared["n_head"]
    hd = C // H
    Tc, ce = cross_input.shape[1], cross_input.shape[2]

    # fused projections: each activation streamed through one matmul
    proj_self = linear(x.reshape(B * T, C), prepared["W_self"],
                       prepared["b_self"]).reshape(B, T, 4 * C)
    proj_cross = linear(cross_input.reshape(B * Tc, ce), prepared["W_cross"],
                        prepared["b_cross"]).reshape(B, Tc, 2 * C)

    def split_heads(z, off, t):
        # (B, t, k*C) -> per-head (B, H, t, hd) for the C-wide slab at `off`
        return z[..., off * C:(off + 1) * C].reshape(B, t, H, hd).transpose(0, 2, 1, 3)

    q = split_heads(proj_self, 0, T)
    k = split_heads(proj_self, 1, T)
    v = split_heads(proj_self, 2, T)
    qc = split_heads(proj_self, 3, T)
    kc = split_heads(proj_cross, 0, Tc)
    vc = split_heads(proj_cross, 1, Tc)

    y = attention(q, k, v, qc, kc, vc)                 # (B, H, T, hd)
    y = y.transpose(0, 2, 1, 3).reshape(B * T, C)      # lane-dense (B*T, C)

    out = linear(y, prepared["Wp"], prepared["bp"])
    # TODO(synk): attn_drop / resid_drop (training-mode dropout) omitted; identity in eval.
    return out.reshape(B, T, C)


# -------------------------- pure-JAX reference ----------------------------- #
def reference(params, x, cross_input):
    B, T, C = x.shape
    H = params["n_head"]
    hd = C // H
    Tc = cross_input.shape[1]

    def lin(z, w, b):
        return z @ w + b

    def heads(z, t):
        return z.reshape(B, t, H, hd).transpose(0, 2, 1, 3)

    k = heads(lin(x, params["Wk"], params["bk"]), T)
    q = heads(lin(x, params["Wq"], params["bq"]), T)
    v = heads(lin(x, params["Wv"], params["bv"]), T)
    kc = heads(lin(cross_input, params["Wck"], params["bck"]), Tc)
    vc = heads(lin(cross_input, params["Wcv"], params["bcv"]), Tc)
    qc = heads(lin(x, params["Wcq"], params["bcq"]), T)

    scale = 1.0 / math.sqrt(hd)
    att = (q @ jnp.swapaxes(k, -2, -1)) * scale
    mask = jnp.tril(jnp.ones((T, T)))[None, None]
    att = jnp.where(mask == 0, -jnp.inf, att)
    att = jax.nn.softmax(att, axis=-1)
    y = att @ v

    attc = (qc @ jnp.swapaxes(kc, -2, -1)) * scale
    attc = jax.nn.softmax(attc, axis=-1)
    y = y + attc @ vc

    y = y.transpose(0, 2, 1, 3).reshape(B, T, C)
    return lin(y, params["Wp"], params["bp"])


# --------------------------------- main ------------------------------------ #
def make_params(key, n_embd, cross_embed, n_heads):
    ks = jax.random.split(key, 14)
    std = 0.02

    def w(k, i, o):
        return (std * jax.random.normal(k, (i, o))).astype(jnp.float32)

    def b(k, o):
        return (std * jax.random.normal(k, (o,))).astype(jnp.float32)

    return {
        "n_head": n_heads,
        "Wk": w(ks[0], n_embd, n_embd),        "bk": b(ks[1], n_embd),
        "Wq": w(ks[2], n_embd, n_embd),        "bq": b(ks[3], n_embd),
        "Wv": w(ks[4], n_embd, n_embd),        "bv": b(ks[5], n_embd),
        "Wck": w(ks[6], cross_embed, n_embd),  "bck": b(ks[7], n_embd),
        "Wcq": w(ks[8], n_embd, n_embd),       "bcq": b(ks[9], n_embd),
        "Wcv": w(ks[10], cross_embed, n_embd), "bcv": b(ks[11], n_embd),
        "Wp": w(ks[12], n_embd, n_embd),       "bp": b(ks[13], n_embd),
    }


if __name__ == "__main__":
    B, T, C = 2, 8, 32          # batch, seq, n_embd
    n_heads = 4
    cross_embed = 16
    T_C = 8                     # cross-input sequence length
    # block_size buffer only provides the causal mask; the mask is built in-kernel.

    key = jax.random.PRNGKey(0)
    kp, kx, kc = jax.random.split(key, 3)
    params = make_params(kp, C, cross_embed, n_heads)
    prepared = prepare_params(params)   # one-time weight fusion / scale-fold / bf16 cast
    x = jax.random.normal(kx, (B, T, C), dtype=jnp.float32)
    cross_input = jax.random.normal(kc, (B, T_C, cross_embed), dtype=jnp.float32)

    out = causal_self_cross_attention(prepared, x, cross_input)
    out = jax.block_until_ready(out)

    ref = reference(params, x, cross_input)
    assert out.shape == (B, T, C)
    # tolerance covers bf16 MXU operands + approx-reciprocal softmax normalization
    assert jnp.allclose(out, ref, atol=3e-2, rtol=3e-2), "mismatch vs reference"
    print("KERNEL_OK")
</pallas_src>

<mosaic_0001>
module attributes {stable_mosaic.version = 11 : i64} {
  func.func @_linear_kernel(%arg0: i32, %arg1: i32, %arg2: i32, %arg3: memref<16x32xf32, #tpu.memory_space<vmem>>, %arg4: memref<32x128xbf16, #tpu.memory_space<vmem>>, %arg5: memref<1x128xf32, #tpu.memory_space<vmem>>, %arg6: memref<16x128xf32, #tpu.memory_space<vmem>>, %arg7: memref<16x128xf32, #tpu.memory_space<vmem>>) attributes {dimension_semantics = [#tpu.dimension_semantics<parallel>, #tpu.dimension_semantics<parallel>, #tpu.dimension_semantics<arbitrary>], iteration_bounds = array<i64: 1, 1, 1>, scalar_prefetch = 0 : i64, scratch_operands = 1 : i64, tpu.core_type = #tpu.core_type<tc>, window_params = [{transform_indices = @transform_0, window_bounds = array<i64: 16, 32>}, {transform_indices = @transform_1, window_bounds = array<i64: 32, 128>}, {transform_indices = @transform_2, window_bounds = array<i64: 1, 128>}, {transform_indices = @transform_3, window_bounds = array<i64: 16, 128>}]} {
    %c0_i32 = arith.constant 0 : i32
    %0 = arith.cmpi eq, %arg2, %c0_i32 : i32
    %1 = arith.extui %0 : i1 to i32
    %c0_i32_0 = arith.constant 0 : i32
    %2 = arith.cmpi ne, %1, %c0_i32_0 : i32
    scf.if %2 {
      %cst_10 = arith.constant 0.000000e+00 : f32
      %13 = vector.broadcast %cst_10 : f32 to vector<16x128xf32>
      %c0_11 = arith.constant 0 : index
      %c0_12 = arith.constant 0 : index
      %14 = vector.load %arg7[%c0_11, %c0_12] : memref<16x128xf32, #tpu.memory_space<vmem>>, vector<16x128xf32>
      tpu.vector_store %arg7[%c0_11, %c0_12], %13 {strides = array<i32>} : memref<16x128xf32, #tpu.memory_space<vmem>>, vector<16x128xf32>,
    } else {
    }
    %c0 = arith.constant 0 : index
    %c0_1 = arith.constant 0 : index
    %3 = vector.load %arg7[%c0, %c0_1] : memref<16x128xf32, #tpu.memory_space<vmem>>, vector<16x128xf32>
    %c0_2 = arith.constant 0 : index
    %c0_3 = arith.constant 0 : index
    %4 = vector.load %arg3[%c0_2, %c0_3] : memref<16x32xf32, #tpu.memory_space<vmem>>, vector<16x32xf32>
    %5 = arith.truncf %4 : vector<16x32xf32> to vector<16x32xbf16>
    %c0_4 = arith.constant 0 : index
    %c0_5 = arith.constant 0 : index
    %6 = vector.load %arg4[%c0_4, %c0_5] : memref<32x128xbf16, #tpu.memory_space<vmem>>, vector<32x128xbf16>
    %cst = arith.constant dense<0.000000e+00> : vector<16x128xf32>
    %7 = tpu.matmul %5, %6, %cst {dimension_numbers = #tpu.dot_dimension_numbers<[1], [0], [0], [1], [0, 0, 1, 1], [], []>} : vector<16x32xbf16>, vector<32x128xbf16>, vector<16x128xf32> -> vector<16x128xf32>
    %8 = arith.addf %3, %7 : vector<16x128xf32>
    %c0_6 = arith.constant 0 : index
    %c0_7 = arith.constant 0 : index
    %9 = vector.load %arg7[%c0_6, %c0_7] : memref<16x128xf32, #tpu.memory_space<vmem>>, vector<16x128xf32>
    tpu.vector_store %arg7[%c0_6, %c0_7], %8 {strides = array<i32>} : memref<16x128xf32, #tpu.memory_space<vmem>>, vector<16x128xf32>,
    %c0_i32_8 = arith.constant 0 : i32
    %10 = arith.cmpi eq, %arg2, %c0_i32_8 : i32
    %11 = arith.extui %10 : i1 to i32
    %c0_i32_9 = arith.constant 0 : i32
    %12 = arith.cmpi ne, %11, %c0_i32_9 : i32
    scf.if %12 {
      %c0_10 = arith.constant 0 : index
      %c0_11 = arith.constant 0 : index
      %13 = vector.load %arg7[%c0_10, %c0_11] : memref<16x128xf32, #tpu.memory_space<vmem>>, vector<16x128xf32>
      %c0_12 = arith.constant 0 : index
      %c0_13 = arith.constant 0 : index
      %14 = vector.load %arg5[%c0_12, %c0_13] : memref<1x128xf32, #tpu.memory_space<vmem>>, vector<1x128xf32>
      %15 = vector.broadcast %14 : vector<1x128xf32> to vector<16x128xf32>
      %16 = arith.addf %13, %15 : vector<16x128xf32>
      %c0_14 = arith.constant 0 : index
      %c0_15 = arith.constant 0 : index
      %17 = vector.load %arg6[%c0_14, %c0_15] : memref<16x128xf32, #tpu.memory_space<vmem>>, vector<16x128xf32>
      tpu.vector_store %arg6[%c0_14, %c0_15], %16 {strides = array<i32>} : memref<16x128xf32, #tpu.memory_space<vmem>>, vector<16x128xf32>,
    } else {
    }
    return
  }
  func.func @transform_0(%arg0: i32, %arg1: i32, %arg2: i32) -> (i32, i32) {
    %c0_i32 = arith.constant 0 : i32
    return %arg0, %arg2 : i32, i32
  }
  func.func @transform_1(%arg0: i32, %arg1: i32, %arg2: i32) -> (i32, i32) {
    %c0_i32 = arith.constant 0 : i32
    return %arg2, %arg1 : i32, i32
  }
  func.func @transform_2(%arg0: i32, %arg1: i32, %arg2: i32) -> (i32, i32) {
    %c0_i32 = arith.constant 0 : i32
    %c0_i32_0 = arith.constant 0 : i32
    return %c0_i32, %arg1 : i32, i32
  }
  func.func @transform_3(%arg0: i32, %arg1: i32, %arg2: i32) -> (i32, i32) {
    %c0_i32 = arith.constant 0 : i32
    return %arg0, %arg1 : i32, i32
  }
}

</mosaic_0001>

<llo_original>
// kernel: tpu_custom_call.1
$region0: #{tpu_custom_call.1}
  #allocation0 [shape = 'u32[]', space=smem, size = 0x4, offset = 0x4, fixed_abs, tag = 'smem constant byte address 0x4 - core index']
  #allocation1 [shape = 'u32[144,128]{1,0:T(1,128)}', space=vmem, size = 0x12000, scoped, tag = 'internal scratch']
  #allocation2 [shape = 'f32[16,128]{1,0:T(8,128)}', space=vmem, size = 0x2000, scoped, tag = 'scratch operand']
  %s0 = inlined_call_operand.hbm [shape: f32[16,32], index: 0, kind: input, shape index: {}]
  %s1 = inlined_call_operand.hbm [shape: bf16[32,128], index: 1, kind: input, shape index: {}]
  %s2 = inlined_call_operand.vmem [shape: f32[1,128], index: 2, kind: input, shape index: {}]
  %s3 = inlined_call_operand.hbm [shape: f32[16,128], index: 3, kind: output, shape index: {}]
  %s4 = sld [smem:[#allocation0]]
  $region38: #{tpu_custom_call.1} parent=0
    _
  %s6 = ssub.s32 1, %s4
  %s7 = scalar_select 0, %s6, %s4
  $region1: #{tpu_custom_call.1} parent=0
    #allocation3 [shape = 'u8[8192]{0}', space=vmem, size = 0x2000, scoped, tag = 'input window, operand 0, single buffered']
    #allocation4 [shape = 's32[1]{0}', space=sflag, size = 0x4, scoped, tag = 'scoped memory for tpu_custom_call.1']
    #allocation5 [shape = 's32[1]{0}', space=sflag, size = 0x4, scoped, tag = 'scoped memory for tpu_custom_call.1']
    #allocation6 [shape = 'u8[8192]{0}', space=vmem, size = 0x2000, scoped, tag = 'input window, operand 1, single buffered']
    #allocation7 [shape = 's32[1]{0}', space=sflag, size = 0x4, scoped, tag = 'scoped memory for tpu_custom_call.1']
    #allocation8 [shape = 'u8[8192]{0}', space=vmem, size = 0x2000, scoped, tag = 'output window, operand 0, single buffered']
    %8 = vsyncpa [#allocation4], 0
    %9 = vsyncpa [#allocation7], 0
    %10 = vsyncpa [#allocation5], 0
    // Predicated region
    $region2: #{tpu_custom_call.1} parent=1 // pred_check
      _
    $region3: #{tpu_custom_call.1} parent=1 // pred_check_branch
      %12 = sbr.rel (0) target = $region5
    $region4: #{tpu_custom_call.1} parent=1 // pred_region
      %s14 = ssub.s32 256, 256
      %15 = vsyncadd [#allocation4], %s14
      %s16 = sshll.u32 [#allocation3], 4
      %s17 = int_to_ptr.vmem [resolvable:$true] %s16
      %22 = dma.hbm_to_vmem [thread:$0]  %s0, 256, %s17, [#allocation4], 128, 128, 8
    $region5: #{tpu_custom_call.1} parent=1 // pred_fallthru
      _
    // Predicated region
    $region6: #{tpu_custom_call.1} parent=1 // pred_check
      _
    $region7: #{tpu_custom_call.1} parent=1 // pred_check_branch
      %24 = sbr.rel (0) target = $region9
    $region8: #{tpu_custom_call.1} parent=1 // pred_region
      %s26 = ssub.s32 256, 256
      %27 = vsyncadd [#allocation7], %s26
      %s28 = sshll.u32 [#allocation6], 4
      %s29 = int_to_ptr.vmem [resolvable:$true] %s28
      %34 = dma.hbm_to_vmem [thread:$0]  %s1, 256, %s29, [#allocation7], 64, 64, 4
    $region9: #{tpu_custom_call.1} parent=1 // pred_fallthru
      _
    // Predicated region
    $region10: #{tpu_custom_call.1} parent=1 // pred_check
      _
    $region11: #{tpu_custom_call.1} parent=1 // pred_check_branch
      %36 = sbr.rel (0) target = $region13
    $region12: #{tpu_custom_call.1} parent=1 // pred_region
      _
    $region13: #{tpu_custom_call.1} parent=1 // pred_fallthru
      _
    // Predicated region
    $region14: #{tpu_custom_call.1} parent=1 // pred_check
      _
    $region15: #{tpu_custom_call.1} parent=1 // pred_check_branch
      %38 = sbr.rel (0) target = $region17
    $region16: #{tpu_custom_call.1} parent=1 // pred_region
      %39 = dma.done [#allocation4], 256
    $region17: #{tpu_custom_call.1} parent=1 // pred_fallthru
      _
    // Predicated region
    $region18: #{tpu_custom_call.1} parent=1 // pred_check
      _
    $region19: #{tpu_custom_call.1} parent=1 // pred_check_branch
      %41 = sbr.rel (0) target = $region21
    $region20: #{tpu_custom_call.1} parent=1 // pred_region
      %42 = dma.done [#allocation7], 256
    $region21: #{tpu_custom_call.1} parent=1 // pred_fallthru
      _
    %p44 = scmp.eq.s32.totalorder 0, 0
    // Predicated region
    $region22: #{tpu_custom_call.1} parent=1 // pred_check
      %p45 = pneg %p44
    $region23: #{tpu_custom_call.1} parent=1 // pred_check_branch
      %47 = sbr.rel (%p45) target = $region25
    $region24: #{tpu_custom_call.1} parent=1 // pred_region
      %48 = vst [vmem:[#allocation2] sm:$0xff] 0.0
      %49 = vst [vmem:[#allocation2 + $0x8] sm:$0xff] 0.0
    $region25: #{tpu_custom_call.1} parent=1 // pred_fallthru
      _
    %v50 = vld [vmem:[#allocation2] sm:$0xff]
    %v51 = vld [vmem:[#allocation2 + $0x8] sm:$0xff]
    %v52 = vld [vmem:[#allocation3] sm:$0xff]
    %v53 = vld [vmem:[#allocation3 + $0x8] sm:$0xff]
    %v54 = vpack.c.bf16 %v53, %v52
    %v55 = vld [vmem:[#allocation6] sm:$0xf]
    %v56 = vld [vmem:[#allocation6 + $0x4] sm:$0xf]
    %v57 = vld [vmem:[#allocation6 + $0x8] sm:$0xf]
    %v58 = vld [vmem:[#allocation6 + $0xc] sm:$0xf]
    %v63 = vunpack.c.l.b16 %v55
    %v64 = vunpack.c.l.b16 %v56
    %v65 = vunpack.c.l.b16 %v57
    %v66 = vunpack.c.l.b16 %v58
    %v67 = vpack.c.b16 %v64, %v63
    %v68 = vpack.c.b16 %v66, %v65
    %vm71 = vcmask 261120
    %v73 = vsel %vm71, %v54, 0
    %75 = vmatprep.subr.bf16.mxu0 0
    %76 = vmatpush1.bf16.msra.mxu0 %v67
    %77 = vmatprep.subr.bf16.mxu0 0
    %78 = vmatpush1.bf16.msra.mxu0 %v68
    %79 = vmatprep.subr.bf16.mxu0 0
    %80 = vmatpush1.bf16.msra.mxu0 0
    %81 = vmatprep.subr.bf16.mxu0 0
    %82 = vmatpush1.bf16.msra.mxu0 0
    %83 = vmatprep.subr.bf16.mxu0 0
    %84 = vmatpush1.bf16.msra.mxu0 0
    %85 = vmatprep.subr.bf16.mxu0 0
    %86 = vmatpush1.bf16.msra.mxu0 0
    %87 = vmatprep.subr.bf16.mxu0 0
    %88 = vmatpush1.bf16.msra.mxu0 0
    %89 = vmatprep.subr.bf16.mxu0 0
    %90 = vmatpush1.bf16.msra.mxu0 0
    %91 = vmatprep.subr.bf16.mxu0 0
    %92 = vmatpush1.bf16.msra.mxu0 0
    %93 = vmatprep.subr.bf16.mxu0 0
    %94 = vmatpush1.bf16.msra.mxu0 0
    %95 = vmatprep.subr.bf16.mxu0 0
    %96 = vmatpush1.bf16.msra.mxu0 0
    %97 = vmatprep.subr.bf16.mxu0 0
    %98 = vmatpush1.bf16.msra.mxu0 0
    %99 = vmatprep.subr.bf16.mxu0 0
    %100 = vmatpush1.bf16.msra.mxu0 0
    %101 = vmatprep.subr.bf16.mxu0 0
    %102 = vmatpush1.bf16.msra.mxu0 0
    %103 = vmatprep.subr.bf16.mxu0 0
    %104 = vmatpush1.bf16.msra.mxu0 0
    %105 = vmatprep.subr.bf16.mxu0 0
    %106 = vmatpush1.bf16.msra.mxu0 0
    %107 = vmatprep.mubr.bf16.mxu0 0
    %108 = vmatmul.mubr.bf16.gmra.mrb[0].mxu0 %v73
    %v109 = vpop.f32.mrb[0].mxu0
    %v110 = vadd.f32 0.0, %v109
    %v111 = vpop.f32.mrb[0].mxu0
    %v112 = vpop.f32.mrb[0].mxu0
    %v113 = vadd.f32 0.0, %v112
    %v114 = vpop.f32.mrb[0].mxu0
    %115 = vdwg.mxu0
    %v116 = vadd.f32 %v50, %v110
    %v117 = vadd.f32 %v51, %v113
    %118 = vst [vmem:[#allocation2] sm:$0xff] %v116
    %119 = vst [vmem:[#allocation2 + $0x8] sm:$0xff] %v117
    // Predicated region
    $region26: #{tpu_custom_call.1} parent=1 // pred_check
      %p120 = pneg %p44
    $region27: #{tpu_custom_call.1} parent=1 // pred_check_branch
      %122 = sbr.rel (%p120) target = $region29
    $region28: #{tpu_custom_call.1} parent=1 // pred_region
      %v123 = vld [vmem:[#allocation2] sm:$0xff]
      %v124 = vld [vmem:[#allocation2 + $0x8] sm:$0xff]
      %v125 = vld [vmem:[%s2] sm:$0x1]
      %v127 = vlaneseq
      %v128 = vshrl.u32 %v127, 7
      %v129 = vsub.s32 0, %v128
      %v130 = vrot.slane %v125, %v129
      %v132 = vadd.f32 %v123, %v130
      %v133 = vadd.f32 %v124, %v130
      %134 = vst [vmem:[#allocation8] sm:$0xff] %v132
      %135 = vst [vmem:[#allocation8 + $0x8] sm:$0xff] %v133
    $region29: #{tpu_custom_call.1} parent=1 // pred_fallthru
      _
    // Predicated region
    $region30: #{tpu_custom_call.1} parent=1 // pred_check
      _
    $region31: #{tpu_custom_call.1} parent=1 // pred_check_branch
      %137 = sbr.rel (0) target = $region33
    $region32: #{tpu_custom_call.1} parent=1 // pred_region
      %s139 = ssub.s32 256, 256
      %140 = vsyncadd [#allocation5], %s139
      %s141 = sshll.u32 [#allocation8], 4
      %s142 = int_to_ptr.vmem [resolvable:$true] %s141
      %147 = dma.vmem_to_hbm [thread:$0]  %s142, 256, %s3, [#allocation5], 128, 128, 8
    $region33: #{tpu_custom_call.1} parent=1 // pred_fallthru
      _
    // Predicated region
    $region34: #{tpu_custom_call.1} parent=1 // pred_check
      _
    $region35: #{tpu_custom_call.1} parent=1 // pred_check_branch
      %149 = sbr.rel (0) target = $region37
    $region36: #{tpu_custom_call.1} parent=1 // pred_region
      %150 = dma.done [#allocation5], 256
    $region37: #{tpu_custom_call.1} parent=1 // pred_fallthru
      _
    %151 = vsyncpa [#allocation4], 1
    %152 = vsyncpa [#allocation7], 1
    %153 = vsyncpa [#allocation5], 1

</llo_original>
